<compile_context>
chip_gen: v7x
topology: tpu7x:2x2x1
jax: 0.10.0
libtpu: 0.0.40
codegen_flags: <defaults>
</compile_context>

<pallas_src>
import math

import jax
import jax.numpy as jnp
from jax import lax
from jax.experimental import pallas as pl
from jax.experimental.pallas import tpu as pltpu


def _cdiv(a, b):
    return (a + b - 1) // b


def _round_up(a, b):
    return _cdiv(a, b) * b


def _make_causal_kernel(tile_rows, TL, CH, TB, L):
    """Kernel over one (tile_rows x TB) block; TB = CH * TL sub-chunks."""
    needs_mask = (L % TB) != 0  # only the ragged-L case needs column masking

    def kernel(x_ref, t_ref, inv_ref, o_ref, carry_ref):
        # x_ref:    (tile_rows, TB)  current row-tile / L-block
        # t_ref:    (TL, TL)         causal matrix, constant across the grid (resident)
        # inv_ref:  (1, TB)          1 / (global_position + 1) for this block
        # o_ref:    (tile_rows, TB)
        # carry_ref:(tile_rows, 1)   running sum carried across L blocks (f32)
        l = pl.program_id(1)

        @pl.when(l == 0)
        def _():
            carry_ref[...] = jnp.zeros_like(carry_ref)

        if needs_mask:
            # Lane index within a sub-chunk; hoisted out of the sub-chunk loop.
            col_iota = lax.broadcasted_iota(jnp.int32, (tile_rows, TL), 1)
            block_start = l * TB  # global column offset of this block

        # Static (small) unrolled loop over the CH sub-chunks inside this block.
        for c in range(CH):
            xs = x_ref[:, c * TL:(c + 1) * TL]
            if needs_mask:
                # Zero out columns past the end of the real L axis so undefined
                # edge-block data (possibly NaN/Inf) cannot pollute valid outputs
                # through the matmul (NaN * 0 = NaN).
                valid = L - block_start - c * TL
                xs = jnp.where(col_iota < valid, xs, 0)

            # Prefix sums within the sub-chunk on the MXU, accumulated in f32.
            csum = jnp.dot(xs, t_ref[...], preferred_element_type=jnp.float32)
            csum = csum + carry_ref[...]  # add running total of everything before

            # Cumulative mean = running sum * 1/(position + 1) (precomputed).
            o_ref[:, c * TL:(c + 1) * TL] = (
                csum * inv_ref[:, c * TL:(c + 1) * TL]
            ).astype(o_ref.dtype)

            # New carry = total sum through the end of this sub-chunk.
            carry_ref[...] = csum[:, TL - 1:TL]

    return kernel


def causal_pooling(x, n_in):
    """x: (B, C, *spatial) with C == n_in. Returns cumulative mean, same shape."""
    x_sz = x.shape
    B, C = x_sz[0], x_sz[1]
    assert C == n_in
    L = math.prod(x_sz[2:]) if len(x_sz) > 2 else 1
    rows = B * C
    assert rows >= 1 and L >= 1

    # --- L tiling: TL = matmul chunk width ----------------------------------
    if L >= 256:
        TL = 256                 # matches 256-wide MXU on v6e/v7x; mem-bound everywhere
    elif L >= 128:
        TL = 128
    else:
        TL = L                   # tiny case: block last dim == full array dim (allowed)

    # --- row tiling -----------------------------------------------------------
    if rows < 8:
        tile_rows = rows         # single block equal to the full dim
    else:
        tile_rows = min(512, (rows // 8) * 8)
        if rows >= 16:
            # Ensure >= 2 reasonably balanced row tiles so both v7x TensorCores
            # get work on the 'parallel' row axis.
            tile_rows = min(tile_rows, max(8, _round_up(_cdiv(rows, 2), 8)))

    # --- batch CH sub-chunks per block so per-step DMAs are not tiny ---------
    # Target ~128K elements (512 KiB f32) per block; never exceed the real L extent.
    ch_cap = max(1, (128 * 1024) // (tile_rows * TL))
    CH = max(1, min(8, ch_cap, L // TL))
    TB = CH * TL                 # block width along L (multiple of 128, or == L if L<128)

    grid = (_cdiv(rows, tile_rows), _cdiv(L, TB))

    x2d = x.reshape(rows, L)     # free (contiguous view), no padding / extra HBM traffic

    # Causal matrix T[i, j] = 1 iff i <= j, in x's dtype (0/1 exact in bf16 too).
    idx = jnp.arange(TL, dtype=jnp.int32)
    causal_t = (idx[:, None] <= idx[None, :]).astype(x.dtype)

    # Reciprocal denominators 1/(pos + 1), f32, covering the full grid extent
    # (tiny array; extra tail entries are never consumed by valid outputs).
    L_cover = grid[1] * TB
    inv_denom = (1.0 / (jnp.arange(L_cover, dtype=jnp.float32) + 1.0)).reshape(1, L_cover)

    kernel = _make_causal_kernel(tile_rows, TL, CH, TB, L)

    out2d = pl.pallas_call(
        kernel,
        out_shape=jax.ShapeDtypeStruct((rows, L), x.dtype),
        grid_spec=pltpu.PrefetchScalarGridSpec(
            num_scalar_prefetch=0,
            grid=grid,
            in_specs=[
                pl.BlockSpec((tile_rows, TB), lambda r, l: (r, l)),   # x
                pl.BlockSpec((TL, TL), lambda r, l: (0, 0)),          # T (resident)
                pl.BlockSpec((1, TB), lambda r, l: (0, l)),           # 1/(pos+1)
            ],
            out_specs=pl.BlockSpec((tile_rows, TB), lambda r, l: (r, l)),
            scratch_shapes=[pltpu.VMEM((tile_rows, 1), jnp.float32)],  # carry
        ),
        compiler_params=pltpu.CompilerParams(
            # L axis must stay innermost and sequential ('arbitrary') for the carry.
            dimension_semantics=("parallel", "arbitrary"),
        ),
    )(x2d, causal_t, inv_denom)

    return out2d.reshape(x_sz)


def causal_pooling_ref(x, n_in):
    x_sz = x.shape
    B, C = x_sz[0], x_sz[1]
    L = math.prod(x_sz[2:]) if len(x_sz) > 2 else 1
    pool = x.reshape(B, C, L).astype(jnp.float32)
    pool = jnp.cumsum(pool, axis=2) / (jnp.arange(L, dtype=jnp.float32) + 1.0).reshape(1, 1, -1)
    return pool.reshape(x_sz).astype(x.dtype)


if __name__ == "__main__":
    # Module config: Causal(n_in=4, n_out=4, n_dim=2)  (n_in must equal n_out)
    n_in = 4
    key = jax.random.PRNGKey(0)
    k1, k2, k3 = jax.random.split(key, 3)

    # Test 1: canonical small shape — single aligned block, no masking path.
    x = jax.random.normal(k1, (2, n_in, 16, 16), dtype=jnp.float32)
    out = jax.block_until_ready(causal_pooling(x, n_in))
    ref = causal_pooling_ref(x, n_in)
    assert out.shape == x.shape
    assert jnp.allclose(out, ref, atol=1e-4, rtol=1e-4), "mismatch vs reference (test 1)"

    # Test 2: ragged L (1600, not a multiple of TB) — exercises the in-kernel column
    # mask, the multi-block carry, and partial output writeback (no wrapper pad/slice).
    x2 = jax.random.normal(k2, (2, n_in, 40, 40), dtype=jnp.float32)
    out2 = jax.block_until_ready(causal_pooling(x2, n_in))
    ref2 = causal_pooling_ref(x2, n_in)
    assert out2.shape == x2.shape
    assert jnp.allclose(out2, ref2, atol=1e-3, rtol=1e-3), "mismatch vs reference (test 2)"

    # Test 3: rows not a multiple of the row tile (B*C = 12) — exercises the ragged
    # row edge block (garbage rows never written back).
    x3 = jax.random.normal(k3, (3, n_in, 16, 16), dtype=jnp.float32)
    out3 = jax.block_until_ready(causal_pooling(x3, n_in))
    ref3 = causal_pooling_ref(x3, n_in)
    assert out3.shape == x3.shape
    assert jnp.allclose(out3, ref3, atol=1e-4, rtol=1e-4), "mismatch vs reference (test 3)"

    print("KERNEL_OK")
</pallas_src>

<mosaic_0001>
module attributes {stable_mosaic.version = 11 : i64} {
  func.func @kernel(%arg0: i32, %arg1: i32, %arg2: memref<8x256xf32, #tpu.memory_space<vmem>>, %arg3: memref<256x256xf32, #tpu.memory_space<vmem>>, %arg4: memref<1x256xf32, #tpu.memory_space<vmem>>, %arg5: memref<8x256xf32, #tpu.memory_space<vmem>>, %arg6: memref<8x1xf32, #tpu.memory_space<vmem>>) attributes {dimension_semantics = [#tpu.dimension_semantics<parallel>, #tpu.dimension_semantics<arbitrary>], iteration_bounds = array<i64: 1, 1>, scalar_prefetch = 0 : i64, scratch_operands = 1 : i64, tpu.core_type = #tpu.core_type<tc>, window_params = [{transform_indices = @transform_0, window_bounds = array<i64: 8, 256>}, {pipeline_mode = #tpu.pipeline_mode<synchronous>, transform_indices = @transform_1, window_bounds = array<i64: 256, 256>}, {transform_indices = @transform_2, window_bounds = array<i64: 1, 256>}, {transform_indices = @transform_3, window_bounds = array<i64: 8, 256>}]} {
    %c0_i32 = arith.constant 0 : i32
    %0 = arith.cmpi eq, %arg1, %c0_i32 : i32
    %1 = arith.extui %0 : i1 to i32
    %c0_i32_0 = arith.constant 0 : i32
    %2 = arith.cmpi ne, %1, %c0_i32_0 : i32
    scf.if %2 {
      %cst_12 = arith.constant 0.000000e+00 : f32
      %15 = vector.broadcast %cst_12 : f32 to vector<8x1xf32>
      %c0_13 = arith.constant 0 : index
      %c0_14 = arith.constant 0 : index
      %16 = vector.load %arg6[%c0_13, %c0_14] : memref<8x1xf32, #tpu.memory_space<vmem>>, vector<8x1xf32>
      tpu.vector_store %arg6[%c0_13, %c0_14], %15 {strides = array<i32>} : memref<8x1xf32, #tpu.memory_space<vmem>>, vector<8x1xf32>,
    } else {
    }
    %c0 = arith.constant 0 : index
    %c0_1 = arith.constant 0 : index
    %3 = vector.load %arg2[%c0, %c0_1] : memref<8x256xf32, #tpu.memory_space<vmem>>, vector<8x256xf32>
    %c0_2 = arith.constant 0 : index
    %c0_3 = arith.constant 0 : index
    %4 = vector.load %arg3[%c0_2, %c0_3] : memref<256x256xf32, #tpu.memory_space<vmem>>, vector<256x256xf32>
    %cst = arith.constant dense<0.000000e+00> : vector<8x256xf32>
    %5 = tpu.matmul %3, %4, %cst {dimension_numbers = #tpu.dot_dimension_numbers<[1], [0], [0], [1], [0, 0, 1, 1], [], []>} : vector<8x256xf32>, vector<256x256xf32>, vector<8x256xf32> -> vector<8x256xf32>
    %c0_4 = arith.constant 0 : index
    %c0_5 = arith.constant 0 : index
    %6 = vector.load %arg6[%c0_4, %c0_5] : memref<8x1xf32, #tpu.memory_space<vmem>>, vector<8x1xf32>
    %7 = vector.broadcast %6 : vector<8x1xf32> to vector<8x256xf32>
    %8 = arith.addf %5, %7 : vector<8x256xf32>
    %c0_6 = arith.constant 0 : index
    %c0_7 = arith.constant 0 : index
    %9 = vector.load %arg4[%c0_6, %c0_7] : memref<1x256xf32, #tpu.memory_space<vmem>>, vector<1x256xf32>
    %10 = vector.broadcast %9 : vector<1x256xf32> to vector<8x256xf32>
    %11 = arith.mulf %8, %10 : vector<8x256xf32>
    %c0_8 = arith.constant 0 : index
    %c0_9 = arith.constant 0 : index
    %12 = vector.load %arg5[%c0_8, %c0_9] : memref<8x256xf32, #tpu.memory_space<vmem>>, vector<8x256xf32>
    tpu.vector_store %arg5[%c0_8, %c0_9], %11 {strides = array<i32>} : memref<8x256xf32, #tpu.memory_space<vmem>>, vector<8x256xf32>,
    %13 = vector.extract_strided_slice %8 {offsets = [0, 255], sizes = [8, 1], strides = [1, 1]} : vector<8x256xf32> to vector<8x1xf32>
    %c0_10 = arith.constant 0 : index
    %c0_11 = arith.constant 0 : index
    %14 = vector.load %arg6[%c0_10, %c0_11] : memref<8x1xf32, #tpu.memory_space<vmem>>, vector<8x1xf32>
    tpu.vector_store %arg6[%c0_10, %c0_11], %13 {strides = array<i32>} : memref<8x1xf32, #tpu.memory_space<vmem>>, vector<8x1xf32>,
    return
  }
  func.func @transform_0(%arg0: i32, %arg1: i32) -> (i32, i32) {
    %c0_i32 = arith.constant 0 : i32
    return %arg0, %arg1 : i32, i32
  }
  func.func @transform_1(%arg0: i32, %arg1: i32) -> (i32, i32) {
    %c0_i32 = arith.constant 0 : i32
    %c0_i32_0 = arith.constant 0 : i32
    %c0_i32_1 = arith.constant 0 : i32
    return %c0_i32, %c0_i32_0 : i32, i32
  }
  func.func @transform_2(%arg0: i32, %arg1: i32) -> (i32, i32) {
    %c0_i32 = arith.constant 0 : i32
    %c0_i32_0 = arith.constant 0 : i32
    return %c0_i32, %arg1 : i32, i32
  }
  func.func @transform_3(%arg0: i32, %arg1: i32) -> (i32, i32) {
    %c0_i32 = arith.constant 0 : i32
    return %arg0, %arg1 : i32, i32
  }
}

</mosaic_0001>

<llo_original>
// kernel: tpu_custom_call.1
$region0: #{tpu_custom_call.1}
  #allocation0 [shape = 'u32[]', space=smem, size = 0x4, offset = 0x4, fixed_abs, tag = 'smem constant byte address 0x4 - core index']
  #allocation1 [shape = 'u32[144,128]{1,0:T(1,128)}', space=vmem, size = 0x12000, scoped, tag = 'internal scratch']
  #allocation2 [shape = 'f32[8,1]{1,0:T(8,128)}', space=vmem, size = 0x1000, scoped, tag = 'scratch operand']
  %s0 = inlined_call_operand.hbm [shape: f32[8,256], index: 0, kind: input, shape index: {}]
  %s1 = inlined_call_operand.hbm [shape: f32[256,256], index: 1, kind: input, shape index: {}]
  %s2 = inlined_call_operand.vmem [shape: f32[1,256], index: 2, kind: input, shape index: {}]
  %s3 = inlined_call_operand.hbm [shape: f32[8,256], index: 3, kind: output, shape index: {}]
  %s4 = sld [smem:[#allocation0]]
  $region34: #{tpu_custom_call.1} parent=0
    _
  %s6 = ssub.s32 1, %s4
  %s7 = scalar_select 0, %s6, %s4
  $region1: #{tpu_custom_call.1} parent=0
    #allocation3 [shape = 'u8[8192]{0}', space=vmem, size = 0x2000, scoped, tag = 'input window, operand 0, single buffered']
    #allocation4 [shape = 's32[1]{0}', space=sflag, size = 0x4, scoped, tag = 'scoped memory for tpu_custom_call.1']
    #allocation5 [shape = 's32[1]{0}', space=sflag, size = 0x4, scoped, tag = 'scoped memory for tpu_custom_call.1']
    #allocation6 [shape = 'u8[262144]{0}', space=vmem, size = 0x40000, scoped, tag = 'input window, operand 1, single buffered']
    #allocation7 [shape = 's32[1]{0}', space=sflag, size = 0x4, scoped, tag = 'scoped memory for tpu_custom_call.1']
    #allocation8 [shape = 'u8[8192]{0}', space=vmem, size = 0x2000, scoped, tag = 'output window, operand 0, single buffered']
    %8 = vsyncpa [#allocation4], 0
    %9 = vsyncpa [#allocation7], 0
    %10 = vsyncpa [#allocation5], 0
    // Predicated region
    $region2: #{tpu_custom_call.1} parent=1 // pred_check
      _
    $region3: #{tpu_custom_call.1} parent=1 // pred_check_branch
      %12 = sbr.rel (0) target = $region5
    $region4: #{tpu_custom_call.1} parent=1 // pred_region
      %s14 = ssub.s32 256, 256
      %15 = vsyncadd [#allocation4], %s14
      %s17 = sshll.u32 [#allocation3], 4
      %s18 = int_to_ptr.vmem [resolvable:$true] %s17
      %20 = dma.hbm_to_vmem [thread:$0]  %s0, 256, %s18, [#allocation4]
    $region5: #{tpu_custom_call.1} parent=1 // pred_fallthru
      _
    // Predicated region
    $region6: #{tpu_custom_call.1} parent=1 // pred_check
      _
    $region7: #{tpu_custom_call.1} parent=1 // pred_check_branch
      %22 = sbr.rel (0) target = $region9
    $region8: #{tpu_custom_call.1} parent=1 // pred_region
      %s24 = ssub.s32 8192, 8192
      %25 = vsyncadd [#allocation7], %s24
      %s26 = sshll.u32 [#allocation6], 4
      %s27 = int_to_ptr.vmem [resolvable:$true] %s26
      %32 = dma.hbm_to_vmem [thread:$0]  %s1, 8192, %s27, [#allocation7], 256, 256, 16
    $region9: #{tpu_custom_call.1} parent=1 // pred_fallthru
      _
    // Predicated region
    $region10: #{tpu_custom_call.1} parent=1 // pred_check
      _
    $region11: #{tpu_custom_call.1} parent=1 // pred_check_branch
      %34 = sbr.rel (0) target = $region13
    $region12: #{tpu_custom_call.1} parent=1 // pred_region
      _
    $region13: #{tpu_custom_call.1} parent=1 // pred_fallthru
      _
    // Predicated region
    $region14: #{tpu_custom_call.1} parent=1 // pred_check
      _
    $region15: #{tpu_custom_call.1} parent=1 // pred_check_branch
      %36 = sbr.rel (0) target = $region17
    $region16: #{tpu_custom_call.1} parent=1 // pred_region
      %37 = dma.done [#allocation4], 256
    $region17: #{tpu_custom_call.1} parent=1 // pred_fallthru
      _
    // Predicated region
    $region18: #{tpu_custom_call.1} parent=1 // pred_check
      _
    $region19: #{tpu_custom_call.1} parent=1 // pred_check_branch
      %39 = sbr.rel (0) target = $region21
    $region20: #{tpu_custom_call.1} parent=1 // pred_region
      %40 = dma.done [#allocation7], 8192
    $region21: #{tpu_custom_call.1} parent=1 // pred_fallthru
      _
    %p41 = scmp.eq.s32.totalorder 0, 0
    // Predicated region
    $region22: #{tpu_custom_call.1} parent=1 // pred_check
      %p42 = pneg %p41
    $region23: #{tpu_custom_call.1} parent=1 // pred_check_branch
      %44 = sbr.rel (%p42) target = $region25
    $region24: #{tpu_custom_call.1} parent=1 // pred_region
      %vm45 = vcmask 7168
      %46 = vst.msk [vmem:[#allocation2] sm:$0xff] %vm45, 0.0
    $region25: #{tpu_custom_call.1} parent=1 // pred_fallthru
      _
    %v47 = vld [vmem:[#allocation3] sm:$0xff]
    %v48 = vld [vmem:[#allocation3 + $0x8] sm:$0xff]
    %v49 = vld [vmem:[#allocation6] sm:$0xff]
    %v50 = vld [vmem:[#allocation6 + $0x8] sm:$0xff]
    %v51 = vld [vmem:[#allocation6 + $0x10] sm:$0xff]
    %v52 = vld [vmem:[#allocation6 + $0x18] sm:$0xff]
    %v53 = vld [vmem:[#allocation6 + $0x20] sm:$0xff]
    %v54 = vld [vmem:[#allocation6 + $0x28] sm:$0xff]
    %v55 = vld [vmem:[#allocation6 + $0x30] sm:$0xff]
    %v56 = vld [vmem:[#allocation6 + $0x38] sm:$0xff]
    %v57 = vld [vmem:[#allocation6 + $0x40] sm:$0xff]
    %v58 = vld [vmem:[#allocation6 + $0x48] sm:$0xff]
    %v59 = vld [vmem:[#allocation6 + $0x50] sm:$0xff]
    %v60 = vld [vmem:[#allocation6 + $0x58] sm:$0xff]
    %v61 = vld [vmem:[#allocation6 + $0x60] sm:$0xff]
    %v62 = vld [vmem:[#allocation6 + $0x68] sm:$0xff]
    %v63 = vld [vmem:[#allocation6 + $0x70] sm:$0xff]
    %v64 = vld [vmem:[#allocation6 + $0x78] sm:$0xff]
    %v65 = vld [vmem:[#allocation6 + $0x80] sm:$0xff]
    %v66 = vld [vmem:[#allocation6 + $0x88] sm:$0xff]
    %v67 = vld [vmem:[#allocation6 + $0x90] sm:$0xff]
    %v68 = vld [vmem:[#allocation6 + $0x98] sm:$0xff]
    %v69 = vld [vmem:[#allocation6 + $0xa0] sm:$0xff]
    %v70 = vld [vmem:[#allocation6 + $0xa8] sm:$0xff]
    %v71 = vld [vmem:[#allocation6 + $0xb0] sm:$0xff]
    %v72 = vld [vmem:[#allocation6 + $0xb8] sm:$0xff]
    %v73 = vld [vmem:[#allocation6 + $0xc0] sm:$0xff]
    %v74 = vld [vmem:[#allocation6 + $0xc8] sm:$0xff]
    %v75 = vld [vmem:[#allocation6 + $0xd0] sm:$0xff]
    %v76 = vld [vmem:[#allocation6 + $0xd8] sm:$0xff]
    %v77 = vld [vmem:[#allocation6 + $0xe0] sm:$0xff]
    %v78 = vld [vmem:[#allocation6 + $0xe8] sm:$0xff]
    %v79 = vld [vmem:[#allocation6 + $0xf0] sm:$0xff]
    %v80 = vld [vmem:[#allocation6 + $0xf8] sm:$0xff]
    %v81 = vld [vmem:[#allocation6 + $0x100] sm:$0xff]
    %v82 = vld [vmem:[#allocation6 + $0x108] sm:$0xff]
    %v83 = vld [vmem:[#allocation6 + $0x110] sm:$0xff]
    %v84 = vld [vmem:[#allocation6 + $0x118] sm:$0xff]
    %v85 = vld [vmem:[#allocation6 + $0x120] sm:$0xff]
    %v86 = vld [vmem:[#allocation6 + $0x128] sm:$0xff]
    %v87 = vld [vmem:[#allocation6 + $0x130] sm:$0xff]
    %v88 = vld [vmem:[#allocation6 + $0x138] sm:$0xff]
    %v89 = vld [vmem:[#allocation6 + $0x140] sm:$0xff]
    %v90 = vld [vmem:[#allocation6 + $0x148] sm:$0xff]
    %v91 = vld [vmem:[#allocation6 + $0x150] sm:$0xff]
    %v92 = vld [vmem:[#allocation6 + $0x158] sm:$0xff]
    %v93 = vld [vmem:[#allocation6 + $0x160] sm:$0xff]
    %v94 = vld [vmem:[#allocation6 + $0x168] sm:$0xff]
    %v95 = vld [vmem:[#allocation6 + $0x170] sm:$0xff]
    %v96 = vld [vmem:[#allocation6 + $0x178] sm:$0xff]
    %v97 = vld [vmem:[#allocation6 + $0x180] sm:$0xff]
    %v98 = vld [vmem:[#allocation6 + $0x188] sm:$0xff]
    %v99 = vld [vmem:[#allocation6 + $0x190] sm:$0xff]
    %v100 = vld [vmem:[#allocation6 + $0x198] sm:$0xff]
    %v101 = vld [vmem:[#allocation6 + $0x1a0] sm:$0xff]
    %v102 = vld [vmem:[#allocation6 + $0x1a8] sm:$0xff]
    %v103 = vld [vmem:[#allocation6 + $0x1b0] sm:$0xff]
    %v104 = vld [vmem:[#allocation6 + $0x1b8] sm:$0xff]
    %v105 = vld [vmem:[#allocation6 + $0x1c0] sm:$0xff]
    %v106 = vld [vmem:[#allocation6 + $0x1c8] sm:$0xff]
    %v107 = vld [vmem:[#allocation6 + $0x1d0] sm:$0xff]
    %v108 = vld [vmem:[#allocation6 + $0x1d8] sm:$0xff]
    %v109 = vld [vmem:[#allocation6 + $0x1e0] sm:$0xff]
    %v110 = vld [vmem:[#allocation6 + $0x1e8] sm:$0xff]
    %v111 = vld [vmem:[#allocation6 + $0x1f0] sm:$0xff]
    %v112 = vld [vmem:[#allocation6 + $0x1f8] sm:$0xff]
    %v113 = vld [vmem:[#allocation2] sm:$0xff]
    %115 = vset.pattern.permute.xlu0 0
    %116 = vperm.xlu0 %115, %v113
    %v117 = vpop.permute.xlu0 %116
    %119 = vmatprep.subr.mxu0 %v50
    %120 = vmatpush1.msra.mxu0 %v49
    %121 = vmatprep.subr.mxu0 %v52
    %122 = vmatpush1.msra.mxu0 %v51
    %123 = vmatprep.subr.mxu0 %v54
    %124 = vmatpush1.msra.mxu0 %v53
    %125 = vmatprep.subr.mxu0 %v56
    %126 = vmatpush1.msra.mxu0 %v55
    %127 = vmatprep.subr.mxu0 %v58
    %128 = vmatpush1.msra.mxu0 %v57
    %129 = vmatprep.subr.mxu0 %v60
    %130 = vmatpush1.msra.mxu0 %v59
    %131 = vmatprep.subr.mxu0 %v62
    %132 = vmatpush1.msra.mxu0 %v61
    %133 = vmatprep.subr.mxu0 %v64
    %134 = vmatpush1.msra.mxu0 %v63
    %135 = vmatprep.subr.mxu0 %v66
    %136 = vmatpush1.msra.mxu0 %v65
    %137 = vmatprep.subr.mxu0 %v68
    %138 = vmatpush1.msra.mxu0 %v67
    %139 = vmatprep.subr.mxu0 %v70
    %140 = vmatpush1.msra.mxu0 %v69
    %141 = vmatprep.subr.mxu0 %v72
    %142 = vmatpush1.msra.mxu0 %v71
    %143 = vmatprep.subr.mxu0 %v74
    %144 = vmatpush1.msra.mxu0 %v73
    %145 = vmatprep.subr.mxu0 %v76
    %146 = vmatpush1.msra.mxu0 %v75
    %147 = vmatprep.subr.mxu0 %v78
    %148 = vmatpush1.msra.mxu0 %v77
    %149 = vmatprep.subr.mxu0 %v80
    %150 = vmatpush1.msra.mxu0 %v79
    %151 = vmatprep.subr.mxu0 %v82
    %152 = vmatpush1.msra.mxu0 %v81
    %153 = vmatprep.subr.mxu0 %v84
    %154 = vmatpush1.msra.mxu0 %v83
    %155 = vmatprep.subr.mxu0 %v86
    %156 = vmatpush1.msra.mxu0 %v85
    %157 = vmatprep.subr.mxu0 %v88
    %158 = vmatpush1.msra.mxu0 %v87
    %159 = vmatprep.subr.mxu0 %v90
    %160 = vmatpush1.msra.mxu0 %v89
    %161 = vmatprep.subr.mxu0 %v92
    %162 = vmatpush1.msra.mxu0 %v91
    %163 = vmatprep.subr.mxu0 %v94
    %164 = vmatpush1.msra.mxu0 %v93
    %165 = vmatprep.subr.mxu0 %v96
    %166 = vmatpush1.msra.mxu0 %v95
    %167 = vmatprep.subr.mxu0 %v98
    %168 = vmatpush1.msra.mxu0 %v97
    %169 = vmatprep.subr.mxu0 %v100
    %170 = vmatpush1.msra.mxu0 %v99
    %171 = vmatprep.subr.mxu0 %v102
    %172 = vmatpush1.msra.mxu0 %v101
    %173 = vmatprep.subr.mxu0 %v104
    %174 = vmatpush1.msra.mxu0 %v103
    %175 = vmatprep.subr.mxu0 %v106
    %176 = vmatpush1.msra.mxu0 %v105
    %177 = vmatprep.subr.mxu0 %v108
    %178 = vmatpush1.msra.mxu0 %v107
    %179 = vmatprep.subr.mxu0 %v110
    %180 = vmatpush1.msra.mxu0 %v109
    %181 = vmatprep.subr.mxu0 %v112
    %182 = vmatpush1.msra.mxu0 %v111
    %183 = vmatprep.mubr.f32.mxu0 %v48
    %184 = vmatmul.mubr.f32.gmra.mrb[0].mxu0 %v47
    %v185 = vpop.f32.mrb[0].mxu0
    %v186 = vadd.f32 %v117, %v185
    %v187 = vpop.f32.mrb[0].mxu0
    %v188 = vadd.f32 %v117, %v187
    %189 = vdwg.mxu0
    %v190 = vld [vmem:[%s2] sm:$0x3]
    %v192 = vlaneseq
    %v193 = vshrl.u32 %v192, 7
    %v194 = vsub.s32 0, %v193
    %v195 = vrot.slane %v190, %v194
    %v196 = vlaneseq
    %v197 = vshrl.u32 %v196, 7
    %v198 = vsub.s32 1, %v197
    %v199 = vrot.slane %v190, %v198
    %v202 = vmul.f32 %v186, %v195
    %v203 = vmul.f32 %v188, %v199
    %204 = vst [vmem:[#allocation8] sm:$0xff] %v202
    %205 = vst [vmem:[#allocation8 + $0x8] sm:$0xff] %v203
    %207 = vrot.lane.b32.xlu0 %v188, 1
    %v208 = vpop.permute.xlu0 %207
    %vm210 = vcmask 7168
    %211 = vst.msk [vmem:[#allocation2] sm:$0xff] %vm210, %v208
    // Predicated region
    $region26: #{tpu_custom_call.1} parent=1 // pred_check
      _
    $region27: #{tpu_custom_call.1} parent=1 // pred_check_branch
      %213 = sbr.rel (0) target = $region29
    $region28: #{tpu_custom_call.1} parent=1 // pred_region
      %s215 = ssub.s32 256, 256
      %216 = vsyncadd [#allocation5], %s215
      %s218 = sshll.u32 [#allocation8], 4
      %s219 = int_to_ptr.vmem [resolvable:$true] %s218
      %221 = dma.vmem_to_hbm [thread:$0]  %s219, 256, %s3, [#allocation5]
    $region29: #{tpu_custom_call.1} parent=1 // pred_fallthru
      _
    // Predicated region
    $region30: #{tpu_custom_call.1} parent=1 // pred_check
      _
    $region31: #{tpu_custom_call.1} parent=1 // pred_check_branch
      %223 = sbr.rel (0) target = $region33
    $region32: #{tpu_custom_call.1} parent=1 // pred_region
      %224 = dma.done [#allocation5], 256
    $region33: #{tpu_custom_call.1} parent=1 // pred_fallthru
      _
    %225 = vsyncpa [#allocation4], 1
    %226 = vsyncpa [#allocation7], 1
    %227 = vsyncpa [#allocation5], 1

</llo_original>
